<compile_context>
chip_gen: v7x
topology: tpu7x:2x2x1
jax: 0.10.0
libtpu: 0.0.40
codegen_flags: <defaults>
</compile_context>

<pallas_src>
import jax
import jax.numpy as jnp
from jax import lax
from jax.experimental import pallas as pl
from jax.experimental.pallas import tpu as pltpu


# --------------------------------------------------------------------------- #
# Kernel 1: per-patch importance scores (Linear(D, 1) + softmax over patches)  #
# --------------------------------------------------------------------------- #
def _probs_kernel(x_ref, w_ref, b_ref, probs_ref):
    """probs = softmax_N(x @ w.T + b) for one batch tile."""
    x = x_ref[...]                         # (tb, N, D), native dtype (bf16/f32)
    w = w_ref[...]                         # (1, D), nn.Linear weight layout
    tb, N, D = x_ref.shape

    if N % 8 == 0:
        # Route the Linear(D, 1) contraction to the MXU (one matvec per tile)
        # instead of a VPU multiply + XLU lane reduction; the MXU is otherwise
        # idle and this keeps the VPU/XLU slots free in a mem-bound kernel.
        x2 = x.reshape(tb * N, D)
        logits = lax.dot_general(
            x2, w, dimension_numbers=(((1,), (1,)), ((), ())),
            preferred_element_type=jnp.float32,
        ).reshape(tb, N, 1)
    else:
        # Fallback when N is not sublane-aligned (the reshape would re-tile):
        # VPU multiply + lane-axis reduce, still a single pass over the tile.
        logits = jnp.sum(
            x.astype(jnp.float32) * w[None].astype(jnp.float32),
            axis=-1, keepdims=True,
        )

    logits = logits + b_ref[0]             # bias scalar from SMEM (no VMEM DMA)

    # Numerically stable softmax over the patch axis (dim=1).
    m = jnp.max(logits, axis=1, keepdims=True)
    e = jnp.exp(logits - m)
    s = jnp.sum(e, axis=1, keepdims=True)
    # EUP approximate reciprocal instead of a VPU divide.
    probs_ref[...] = e * pl.reciprocal(s, approx=True)


def learnable_mask_probs(x, w, b):
    """Returns probs [B, N] float32 = softmax over patches of Linear(D,1)(x)."""
    B, N, D = x.shape
    dtype = x.dtype
    w2 = jnp.asarray(w).reshape(1, D).astype(dtype)    # nn.Linear weight (1, D)
    b1 = jnp.asarray(b).reshape(1).astype(jnp.float32)

    # Batch tile: biggest tile that keeps the double-buffered x window well
    # inside the scoped-VMEM budget (32 MiB -> safe on v5e/v6e/v7x; on v6e this
    # can be pushed toward the 128 MiB physical VMEM for even larger tiles).
    itemsize = jnp.dtype(dtype).itemsize
    tb = min(B, max(1, (8 * 1024 * 1024) // (N * D * itemsize)))
    grid = (pl.cdiv(B, tb),)

    probs3 = pl.pallas_call(
        _probs_kernel,
        out_shape=jax.ShapeDtypeStruct((B, N, 1), jnp.float32),
        grid_spec=pltpu.PrefetchScalarGridSpec(
            num_scalar_prefetch=0,
            grid=grid,
            in_specs=[
                pl.BlockSpec((tb, N, D), lambda i: (i, 0, 0)),        # x, native dtype
                pl.BlockSpec((1, D), lambda i: (0, 0)),               # weight
                pl.BlockSpec(memory_space=pltpu.MemorySpace.SMEM),    # bias scalar
            ],
            out_specs=pl.BlockSpec((tb, N, 1), lambda i: (i, 0, 0)),
        ),
        compiler_params=pltpu.CompilerParams(
            dimension_semantics=("parallel",),   # batch tiles shard across TCs (v7x)
            vmem_limit_bytes=32 * 1024 * 1024,
        ),
    )(x, w2, b1)
    return probs3[..., 0]                                             # (B, N) f32


# --------------------------------------------------------------------------- #
# Kernel 2: fused top-k row gather + straight-through scale                    #
# --------------------------------------------------------------------------- #
def _gather_scale_kernel(idx_ref, x_ref, p_ref, o_ref):
    """o[b, k, :] = x[b, idx[b, k], :] * probs[b, idx[b, k]]."""
    del idx_ref  # only consumed by the index_maps
    o_ref[...] = (x_ref[...].astype(jnp.float32) * p_ref[...]).astype(o_ref.dtype)


def gather_and_scale(x, probs, topk_idx):
    """Gathers the kept patches and applies the straight-through scale (probs)."""
    B, N, D = x.shape
    K = topk_idx.shape[1]
    # Unit dims keep the last two block dims equal to the full array dims, so the
    # big output store stays lane-dense along D (D should ideally be a multiple
    # of 128) and the gathered patch axis is a leading, index-addressable dim.
    x4 = x.reshape(B, N, 1, D)
    p4 = probs.astype(jnp.float32).reshape(B, N, 1, 1)
    idx_flat = topk_idx.reshape(B * K).astype(jnp.int32)  # 1-D: avoids 2-D SMEM padding

    def gather_map(b, k, idx):          # data-dependent row gather via scalar prefetch
        return (b, idx[b * K + k], 0, 0)

    def out_map(b, k, idx):
        return (b, k, 0, 0)

    out4 = pl.pallas_call(
        _gather_scale_kernel,
        out_shape=jax.ShapeDtypeStruct((B, K, 1, D), x.dtype),
        grid_spec=pltpu.PrefetchScalarGridSpec(
            num_scalar_prefetch=1,                    # top-k indices -> SMEM
            grid=(B, K),
            in_specs=[
                pl.BlockSpec((1, 1, 1, D), gather_map),   # one kept row of x
                pl.BlockSpec((1, 1, 1, 1), gather_map),   # its probability
            ],
            out_specs=pl.BlockSpec((1, 1, 1, D), out_map),
        ),
        compiler_params=pltpu.CompilerParams(
            dimension_semantics=("parallel", "arbitrary"),
        ),
    )(idx_flat, x4, p4)
    return out4.reshape(B, K, D)


# --------------------------------------------------------------------------- #
# Full forward pass (matches LearnableMask.forward)                            #
# --------------------------------------------------------------------------- #
def learnable_mask_forward(x, w, b, mask_ratio):
    """Returns (x_masked [B,K,D], hard_mask [B,N], ids_restore [B,N])."""
    B, N, D = x.shape
    K = int(N * (1.0 - mask_ratio))        # static, as in the PyTorch module

    probs = learnable_mask_probs(x, w, b)                          # (B, N) f32

    # TODO(synk): top-k / descending argsort / scatter on the tiny [B, N] score
    # tensor have no clean Pallas TPU equivalent (sorting networks); kept as
    # plain-JAX glue.
    _, topk_idx = jax.lax.top_k(probs, K)                          # (B, K), desc
    hard_mask = jnp.ones((B, N), jnp.float32)
    hard_mask = hard_mask.at[jnp.arange(B)[:, None], topk_idx].set(0.0)

    # Forward value of keep + (probs - keep).detach() is exactly `probs`, and
    # only the kept rows are returned -> fuse gather + scale, never build x_st.
    x_masked = gather_and_scale(x, probs, topk_idx)                # (B, K, D)

    ids_shuffle = jnp.argsort(-probs, axis=1)                      # descending
    ids_restore = jnp.argsort(ids_shuffle, axis=1)
    return x_masked, hard_mask, ids_restore


if __name__ == "__main__":
    B, N, D = 2, 8, 128          # batch, num_patches, feature_dim (lane-dense D)
    mask_ratio = 0.25            # K = int(8 * 0.75) = 6
    K = int(N * (1 - mask_ratio))

    key = jax.random.PRNGKey(0)
    kx, kw, kb = jax.random.split(key, 3)
    x = jax.random.normal(kx, (B, N, D), dtype=jnp.float32)
    bound = 1.0 / (D ** 0.5)     # nn.Linear(D, 1) default init bounds
    w = jax.random.uniform(kw, (D,), minval=-bound, maxval=bound, dtype=jnp.float32)
    b = jax.random.uniform(kb, (1,), minval=-bound, maxval=bound, dtype=jnp.float32)

    x_masked, hard_mask, ids_restore = learnable_mask_forward(x, w, b, mask_ratio)
    jax.block_until_ready((x_masked, hard_mask, ids_restore))

    # Pure-JAX reference of the full forward pass.
    logits_ref = jnp.einsum("bnd,d->bn", x, w) + b[0]
    probs_ref = jax.nn.softmax(logits_ref, axis=1)
    _, idx_ref = jax.lax.top_k(probs_ref, K)
    hard_ref = jnp.ones((B, N), jnp.float32)
    hard_ref = hard_ref.at[jnp.arange(B)[:, None], idx_ref].set(0.0)
    xm_ref = jnp.take_along_axis(x * probs_ref[:, :, None], idx_ref[:, :, None], axis=1)
    ids_restore_ref = jnp.argsort(jnp.argsort(-probs_ref, axis=1), axis=1)

    assert x_masked.shape == (B, K, D)
    assert hard_mask.shape == (B, N) and ids_restore.shape == (B, N)
    assert jnp.allclose(x_masked, xm_ref, atol=5e-3, rtol=5e-3), "x_masked mismatch"
    assert jnp.array_equal(hard_mask, hard_ref), "hard_mask mismatch"
    assert jnp.array_equal(ids_restore, ids_restore_ref), "ids_restore mismatch"

    print("KERNEL_OK")
</pallas_src>

<mosaic_0001>
module attributes {stable_mosaic.version = 11 : i64} {
  func.func @_probs_kernel(%arg0: i32, %arg1: memref<2x8x128xf32, #tpu.memory_space<vmem>>, %arg2: memref<1x128xf32, #tpu.memory_space<vmem>>, %arg3: memref<1xf32, #tpu.memory_space<smem>>, %arg4: memref<2x8x1xf32, #tpu.memory_space<vmem>>) attributes {dimension_semantics = [#tpu.dimension_semantics<parallel>], iteration_bounds = array<i64: 1>, scalar_prefetch = 0 : i64, scratch_operands = 0 : i64, tpu.core_type = #tpu.core_type<tc>, window_params = [{transform_indices = @transform_0, window_bounds = array<i64: 2, 8, 128>}, {pipeline_mode = #tpu.pipeline_mode<synchronous>, transform_indices = @transform_1, window_bounds = array<i64: 1, 128>}, {transform_indices = @transform_2, window_bounds = array<i64: 1>}, {transform_indices = @transform_3, window_bounds = array<i64: 2, 8, 1>}]} {
    %c0 = arith.constant 0 : index
    %c0_0 = arith.constant 0 : index
    %c0_1 = arith.constant 0 : index
    %0 = vector.load %arg1[%c0, %c0_0, %c0_1] : memref<2x8x128xf32, #tpu.memory_space<vmem>>, vector<2x8x128xf32>
    %c0_2 = arith.constant 0 : index
    %c0_3 = arith.constant 0 : index
    %1 = vector.load %arg2[%c0_2, %c0_3] : memref<1x128xf32, #tpu.memory_space<vmem>>, vector<1x128xf32>
    %2 = vector.shape_cast %0 : vector<2x8x128xf32> to vector<16x128xf32>
    %cst = arith.constant dense<0.000000e+00> : vector<16x1xf32>
    %3 = tpu.matmul %2, %1, %cst {dimension_numbers = #tpu.dot_dimension_numbers<[1], [1], [0], [0], [0, 0, 1, 0], [], []>} : vector<16x128xf32>, vector<1x128xf32>, vector<16x1xf32> -> vector<16x1xf32>
    %4 = vector.shape_cast %3 : vector<16x1xf32> to vector<2x8x1xf32>
    %c0_4 = arith.constant 0 : index
    %5 = memref.load %arg3[%c0_4] : memref<1xf32, #tpu.memory_space<smem>>
    %6 = vector.broadcast %5 : f32 to vector<2x8x1xf32>
    %7 = arith.addf %4, %6 : vector<2x8x1xf32>
    %cst_5 = arith.constant dense<0xFF800000> : vector<2x1xf32>
    %8 = vector.multi_reduction <maximumf>, %7, %cst_5 [1] : vector<2x8x1xf32> to vector<2x1xf32>
    %9 = vector.shape_cast %8 : vector<2x1xf32> to vector<2x1x1xf32>
    %10 = vector.broadcast %9 : vector<2x1x1xf32> to vector<2x8x1xf32>
    %11 = arith.subf %7, %10 : vector<2x8x1xf32>
    %12 = math.exp %11 : vector<2x8x1xf32>
    %cst_6 = arith.constant dense<0.000000e+00> : vector<2x1xf32>
    %13 = vector.multi_reduction <add>, %12, %cst_6 [1] : vector<2x8x1xf32> to vector<2x1xf32>
    %14 = vector.shape_cast %13 : vector<2x1xf32> to vector<2x1x1xf32>
    %15 = tpu.reciprocal %14 {approx = true} : vector<2x1x1xf32> -> vector<2x1x1xf32>
    %16 = vector.broadcast %15 : vector<2x1x1xf32> to vector<2x8x1xf32>
    %17 = arith.mulf %12, %16 : vector<2x8x1xf32>
    %c0_7 = arith.constant 0 : index
    %c0_8 = arith.constant 0 : index
    %c0_9 = arith.constant 0 : index
    %18 = vector.load %arg4[%c0_7, %c0_8, %c0_9] : memref<2x8x1xf32, #tpu.memory_space<vmem>>, vector<2x8x1xf32>
    tpu.vector_store %arg4[%c0_7, %c0_8, %c0_9], %17 {strides = array<i32>} : memref<2x8x1xf32, #tpu.memory_space<vmem>>, vector<2x8x1xf32>,
    return
  }
  func.func @transform_0(%arg0: i32) -> (i32, i32, i32) {
    %c0_i32 = arith.constant 0 : i32
    %c0_i32_0 = arith.constant 0 : i32
    %c0_i32_1 = arith.constant 0 : i32
    return %arg0, %c0_i32, %c0_i32_0 : i32, i32, i32
  }
  func.func @transform_1(%arg0: i32) -> (i32, i32) {
    %c0_i32 = arith.constant 0 : i32
    %c0_i32_0 = arith.constant 0 : i32
    %c0_i32_1 = arith.constant 0 : i32
    return %c0_i32, %c0_i32_0 : i32, i32
  }
  func.func @transform_2(%arg0: i32) -> i32 {
    %c0_i32 = arith.constant 0 : i32
    %c0_i32_0 = arith.constant 0 : i32
    return %c0_i32 : i32
  }
  func.func @transform_3(%arg0: i32) -> (i32, i32, i32) {
    %c0_i32 = arith.constant 0 : i32
    %c0_i32_0 = arith.constant 0 : i32
    %c0_i32_1 = arith.constant 0 : i32
    return %arg0, %c0_i32, %c0_i32_0 : i32, i32, i32
  }
}

</mosaic_0001>

<llo_original>
// kernel: tpu_custom_call.1
$region0: #{tpu_custom_call.1}
  #allocation0 [shape = 'u32[]', space=smem, size = 0x4, offset = 0x4, fixed_abs, tag = 'smem constant byte address 0x4 - core index']
  #allocation1 [shape = 'u32[144,128]{1,0:T(1,128)}', space=vmem, size = 0x12000, scoped, tag = 'internal scratch']
  #allocation2 [shape = 'f32[1]{0:T(128)S(6)}', space=smem, size = 0x200, scoped, tag = 'scoped memory for tpu_custom_call.1']
  %s0 = inlined_call_operand.hbm [shape: f32[2,8,128], index: 0, kind: input, shape index: {}]
  %s1 = inlined_call_operand.vmem [shape: f32[1,128], index: 1, kind: input, shape index: {}]
  %s2 = inlined_call_operand.<no memory space> [shape: f32[1], index: 2, kind: input, shape index: {}]
  %s3 = inlined_call_operand.vmem [shape: f32[2,8,1], index: 3, kind: output, shape index: {}]
  %s4 = sld [smem:[#allocation0]]
  $region26: #{tpu_custom_call.1} parent=0
    _
  %s6 = ssub.s32 1, %s4
  %s7 = scalar_select 0, %s6, %s4
  %8 = sst [smem:[#allocation2]] %s2
  $region1: #{tpu_custom_call.1} parent=0
    #allocation3 [shape = 'u8[8192]{0}', space=vmem, size = 0x2000, scoped, tag = 'input window, operand 0, single buffered']
    #allocation4 [shape = 's32[1]{0}', space=sflag, size = 0x4, scoped, tag = 'scoped memory for tpu_custom_call.1']
    %9 = vsyncpa [#allocation4], 0
    // Predicated region
    $region2: #{tpu_custom_call.1} parent=1 // pred_check
      _
    $region3: #{tpu_custom_call.1} parent=1 // pred_check_branch
      %11 = sbr.rel (0) target = $region5
    $region4: #{tpu_custom_call.1} parent=1 // pred_region
      %s13 = ssub.s32 256, 256
      %14 = vsyncadd [#allocation4], %s13
      %s15 = sshll.u32 [#allocation3], 4
      %s16 = int_to_ptr.vmem [resolvable:$true] %s15
      %21 = dma.hbm_to_vmem [thread:$0]  %s0, 256, %s16, [#allocation4], 128, 128, 8
    $region5: #{tpu_custom_call.1} parent=1 // pred_fallthru
      _
    // Predicated region
    $region6: #{tpu_custom_call.1} parent=1 // pred_check
      _
    $region7: #{tpu_custom_call.1} parent=1 // pred_check_branch
      %23 = sbr.rel (0) target = $region9
    $region8: #{tpu_custom_call.1} parent=1 // pred_region
      _
    $region9: #{tpu_custom_call.1} parent=1 // pred_fallthru
      _
    // Predicated region
    $region10: #{tpu_custom_call.1} parent=1 // pred_check
      _
    $region11: #{tpu_custom_call.1} parent=1 // pred_check_branch
      %25 = sbr.rel (0) target = $region13
    $region12: #{tpu_custom_call.1} parent=1 // pred_region
      _
    $region13: #{tpu_custom_call.1} parent=1 // pred_fallthru
      _
    // Predicated region
    $region14: #{tpu_custom_call.1} parent=1 // pred_check
      _
    $region15: #{tpu_custom_call.1} parent=1 // pred_check_branch
      %27 = sbr.rel (0) target = $region17
    $region16: #{tpu_custom_call.1} parent=1 // pred_region
      %28 = dma.done [#allocation4], 256
    $region17: #{tpu_custom_call.1} parent=1 // pred_fallthru
      _
    %v29 = vld [vmem:[#allocation3] sm:$0xff]
    %v30 = vld [vmem:[#allocation3 + $0x8] sm:$0xff]
    %v31 = vld [vmem:[%s1] sm:$0x1]
    %v33 = vlaneseq
    %v34 = vshrl.u32 %v33, 7
    %v35 = vsub.s32 0, %v34
    %v36 = vrot.slane %v31, %v35
    %v38 = vmul.f32 %v29, %v36
    %v39 = vmul.f32 %v30, %v36
    %40 = vadd.xlane.f32.xlu0 %v38
    %v41 = vpop.xlane.xlu0 %40
    %42 = vadd.xlane.f32.xlu0 %v39
    %v43 = vpop.xlane.xlu0 %42
    %s44 = sld [smem:[#allocation2]]
    %v45 = vstv %s44
    %v46 = vadd.f32 %v41, %v45
    %v47 = vadd.f32 %v43, %v45
    %v48 = vrot.slane %v46, 4
    %v49 = vmax.f32 %v46, %v48
    %v50 = vrot.slane %v49, 2
    %v51 = vmax.f32 %v49, %v50
    %v52 = vrot.slane %v51, 1
    %v53 = vmax.f32 %v51, %v52
    %v54 = vrot.slane %v47, 4
    %v55 = vmax.f32 %v47, %v54
    %v56 = vrot.slane %v55, 2
    %v57 = vmax.f32 %v55, %v56
    %v58 = vrot.slane %v57, 1
    %v59 = vmax.f32 %v57, %v58
    %v60 = vsub.f32 %v46, %v53
    %v61 = vsub.f32 %v47, %v59
    %v62 = vmul.f32 %v60, 1.442695
    %v63 = vpow.pop %v62
    %v64 = vmul.f32 %v61, 1.442695
    %v65 = vpow.pop %v64
    %v66 = vrot.slane %v63, 4
    %v67 = vadd.f32 %v63, %v66
    %v68 = vrot.slane %v67, 2
    %v69 = vadd.f32 %v67, %v68
    %v70 = vrot.slane %v69, 1
    %v71 = vadd.f32 %v69, %v70
    %v72 = vrot.slane %v65, 4
    %v73 = vadd.f32 %v65, %v72
    %v74 = vrot.slane %v73, 2
    %v75 = vadd.f32 %v73, %v74
    %v76 = vrot.slane %v75, 1
    %v77 = vadd.f32 %v75, %v76
    %v78 = vrcp.pop %v71
    %v79 = vrcp.pop %v77
    %v80 = vmul.f32 %v63, %v78
    %v81 = vmul.f32 %v65, %v79
    %vm82 = vcmask 7168
    %83 = vst.msk [vmem:[%s3] sm:$0xff] %vm82, %v80
    %84 = vst.msk [vmem:[%s3 + $0x8] sm:$0xff] %vm82, %v81
    // Predicated region
    $region18: #{tpu_custom_call.1} parent=1 // pred_check
      _
    $region19: #{tpu_custom_call.1} parent=1 // pred_check_branch
      %86 = sbr.rel (0) target = $region21
    $region20: #{tpu_custom_call.1} parent=1 // pred_region
      _
    $region21: #{tpu_custom_call.1} parent=1 // pred_fallthru
      _
    // Predicated region
    $region22: #{tpu_custom_call.1} parent=1 // pred_check
      _
    $region23: #{tpu_custom_call.1} parent=1 // pred_check_branch
      %88 = sbr.rel (0) target = $region25
    $region24: #{tpu_custom_call.1} parent=1 // pred_region
      _
    $region25: #{tpu_custom_call.1} parent=1 // pred_fallthru
      _
    %89 = vsyncpa [#allocation4], 1

</llo_original>
